<compile_context>
chip_gen: v6e
topology: v6e:2x2x1
jax: 0.10.0
libtpu: 0.0.40
codegen_flags: <defaults>
</compile_context>

<pallas_src>
import functools

import jax
import jax.numpy as jnp
from jax import lax
from jax.experimental import pallas as pl
from jax.experimental.pallas import tpu as pltpu


def _cross_attn_kernel(xc_ref, xs_ref, wsty_ref, bsty_ref, bo_ref, out_ref,
                       *, exact_softmax: bool):
    # xc_ref:   (1, C, TNc) f32      xs_ref:   (1, C, Ns) f32
    # wsty_ref: (C, 2C+1)  bf16      bsty_ref: (1, 2C+1)  f32
    # bo_ref:   (C, 1)     f32       out_ref:  (1, C, TNc) f32
    C = wsty_ref.shape[0]

    # ---- fused style projection: ght = xs^T @ [Wg^T Wf | Wh^T Wo^T | Wg^T bf]
    # Recomputed per tile ((C, 2C+1) x (C, Ns) -- tiny) so both grid axes stay
    # "parallel" and no persistent scratch is needed.
    xs = xs_ref[0].astype(jnp.bfloat16)                           # (C, Ns)
    ght = lax.dot_general(
        xs, wsty_ref[...],
        dimension_numbers=(((0,), (0,)), ((), ())),
        preferred_element_type=jnp.float32)                       # (Ns, 2C+1)
    ght = ght + bsty_ref[...]                                     # + (1, 2C+1)
    gp_t = ght[:, :C].astype(jnp.bfloat16)        # (Wf^T G)^T       (Ns, C)
    ho_t = ght[:, C:2 * C].astype(jnp.bfloat16)   # (Wo H)^T         (Ns, C)
    row_bias = ght[:, 2 * C:2 * C + 1]            # bf^T G           (Ns, 1) f32

    # ---- content path, transposed scores: Ns on sublanes, Nc lane-dense ----
    xc = xc_ref[0].astype(jnp.bfloat16)                           # (C, TNc)
    # S^T = (Wf^T G)^T @ xc + bf^T G   (== (F^T G)^T with F = Wf xc + bf)
    st = lax.dot_general(
        gp_t, xc,
        dimension_numbers=(((1,), (0,)), ((), ())),
        preferred_element_type=jnp.float32)                       # (Ns, TNc)
    st = st + row_bias

    # softmax over the style axis (sublane axis 0), f32 math
    st = st - jnp.max(st, axis=0, keepdims=True)
    p = jnp.exp(st)
    denom = jnp.sum(p, axis=0, keepdims=True)                     # (1, TNc)
    if exact_softmax:
        p = p / denom
    else:
        p = p * pl.reciprocal(denom, approx=True)                 # EUP, ~free

    # out = (Wo H) @ P^T + bo  -> (C, TNc), lane-dense on Nc
    o = lax.dot_general(
        ho_t, p.astype(jnp.bfloat16),
        dimension_numbers=(((0,), (0,)), ((), ())),
        preferred_element_type=jnp.float32)                       # (C, TNc)
    out_ref[0] = (o + bo_ref[...]).astype(out_ref.dtype)


def _vmem_bytes(C, tile_nc, Ns):
    """Rough per-grid-step VMEM footprint (double-buffered IO + live values)."""
    dbl = 2
    io = dbl * 4 * (2 * C * tile_nc + C * Ns)        # xc + out + xs blocks (f32)
    wts = dbl * ((2 * C + 1) * (2 * C + 4) + 4 * C)  # fused W (bf16) + biases
    style = (2 * C + 1) * Ns * (4 + 2)               # ght f32 + bf16 slices
    scores = Ns * tile_nc * (4 + 4 + 2)              # S^T, P^T (f32) + bf16 P
    content = C * tile_nc * (2 + 4)                  # bf16 xc + f32 o
    return io + wts + style + scores + content


def _candidate_tiles(Nc):
    """Full Nc first, then multiples of 128 that divide Nc, descending."""
    cands = [Nc]
    t = (Nc // 128) * 128
    while t >= 128:
        if t != Nc and Nc % t == 0:
            cands.append(t)
        t -= 128
    return cands


def cross_attn_v8(F_c, F_s, params, tile_nc=None, exact_softmax=False,
                  vmem_budget_bytes=20 * 1024 * 1024):
    """F_c: (b, C, Hc, Wc), F_s: (b, C, Hs, Ws) NCHW f32. Returns (b, C, Hc, Wc) f32."""
    b, C, Hc, Wc = F_c.shape
    _, _, Hs, Ws = F_s.shape
    Nc, Ns = Hc * Wc, Hs * Ws

    # Channels-first flatten == PyTorch .view(); contiguous, no transposes and
    # no wrapper-side dtype-conversion pass over HBM (kernel casts to bf16).
    xc = F_c.reshape(b, C, Nc)
    xs = F_s.reshape(b, C, Ns)

    wf, bf = params["f"]
    wg, bg = params["g"]
    wh, bh = params["h"]
    wo, bo = params["output"]
    wf, wg, wh, wo = (w.astype(jnp.float32) for w in (wf, wg, wh, wo))
    bf, bg, bh, bo = (v.astype(jnp.float32) for v in (bf, bg, bh, bo))

    # Fold the F-conv and the output conv into a single fused style projection
    # (transposed so the kernel's style matmul directly yields (Ns, .) slabs):
    #   cols [0,C)   : Wg^T Wf    -> xs^T-product = (Wf^T G)^T
    #   cols [C,2C)  : Wh^T Wo^T  -> xs^T-product = (Wo H)^T
    #   col  2C      : Wg^T bf    -> xs^T-product = bf^T G  (softmax row bias)
    w_style_t = jnp.concatenate(
        [wg.T @ wf, wh.T @ wo.T, (wg.T @ bf)[:, None]], axis=1
    ).astype(jnp.bfloat16)                                          # (C, 2C+1)
    b_style_t = jnp.concatenate(
        [wf.T @ bg, wo @ bh, (bf @ bg)[None]]
    )[None, :].astype(jnp.float32)                                  # (1, 2C+1)
    bo_c = bo.reshape(C, 1)

    # ---- tile pick from a VMEM-footprint budget (not a fixed ladder) -------
    if tile_nc is None:
        cands = _candidate_tiles(Nc)
        fitting = [t for t in cands if _vmem_bytes(C, t, Ns) <= vmem_budget_bytes]
        if not fitting:
            fitting = [cands[-1]]
        tile_nc = fitting[0]                      # biggest tile that fits
        if b == 1:
            # v7x megacore: with a single batch element, give the "parallel"
            # Nc axis >=2 tiles so both TensorCores get work; costs only one
            # extra ~0.35us grid step on single-TC chips (v5e/v6e).
            multi = [t for t in fitting if Nc // t >= 2]
            if multi:
                tile_nc = multi[0]
    else:
        assert Nc % tile_nc == 0, "tile_nc must divide Nc (no masked tail tile)"
        assert tile_nc == Nc or tile_nc % 128 == 0, \
            "partial Nc tiles must be multiples of 128 (lane-aligned)"
    n_tiles = Nc // tile_nc

    # Explicit scoped-VMEM limit: >= footprint with 2x headroom, capped well
    # under v7x's 64 MiB physical per TensorCore (also valid on v5e/v6e).
    vmem_limit = int(min(max(2 * _vmem_bytes(C, tile_nc, Ns), 32 << 20), 40 << 20))

    kernel = functools.partial(_cross_attn_kernel, exact_softmax=exact_softmax)

    grid_spec = pltpu.PrefetchScalarGridSpec(
        num_scalar_prefetch=0,
        grid=(b, n_tiles),
        in_specs=[
            pl.BlockSpec((1, C, tile_nc), lambda bi, ni: (bi, 0, ni)),   # xc tile
            pl.BlockSpec((1, C, Ns), lambda bi, ni: (bi, 0, 0)),         # xs (batch)
            pl.BlockSpec((C, 2 * C + 1), lambda bi, ni: (0, 0)),         # fused W
            pl.BlockSpec((1, 2 * C + 1), lambda bi, ni: (0, 0)),         # fused bias
            pl.BlockSpec((C, 1), lambda bi, ni: (0, 0)),                 # bo
        ],
        out_specs=pl.BlockSpec((1, C, tile_nc), lambda bi, ni: (bi, 0, ni)),
    )

    out = pl.pallas_call(
        kernel,
        out_shape=jax.ShapeDtypeStruct((b, C, Nc), jnp.float32),
        grid_spec=grid_spec,
        compiler_params=pltpu.CompilerParams(
            dimension_semantics=("parallel", "parallel"),
            vmem_limit_bytes=vmem_limit,
        ),
    )(xc, xs, w_style_t, b_style_t, bo_c)

    return out.reshape(b, C, Hc, Wc)


def _reference(F_c, F_s, params):
    """Pure-JAX f32 reference matching the PyTorch forward exactly."""
    b, C, Hc, Wc = F_c.shape

    def conv1x1(x, w, bias):
        return jnp.einsum("oc,bchw->bohw", w, x) + bias[None, :, None, None]

    wf, bf = params["f"]
    wg, bg = params["g"]
    wh, bh = params["h"]
    wo, bo = params["output"]

    F = conv1x1(F_c, wf, bf).reshape(b, C, -1)
    G = conv1x1(F_s, wg, bg).reshape(b, C, -1)
    H = conv1x1(F_s, wh, bh).reshape(b, C, -1)
    S = jnp.einsum("bcn,bcm->bnm", F, G)            # (b, Nc, Ns)
    S = jax.nn.softmax(S, axis=-1)
    R = jnp.einsum("bcm,bnm->bcn", H, S)            # (b, C, Nc)
    R = R.reshape(b, C, Hc, Wc)
    return conv1x1(R, wo, bo)


def _init_params(key, C):
    params = {}
    for name in ("f", "g", "h", "output"):
        key, kw, kb = jax.random.split(key, 3)
        w = (jax.random.normal(kw, (C, C), jnp.float32) * 0.1).astype(jnp.float32)
        bias = (jax.random.normal(kb, (C,), jnp.float32) * 0.1).astype(jnp.float32)
        params[name] = (w, bias)
    return params


if __name__ == "__main__":
    in_planes = 32        # channel count C
    b = 2
    Hc = Wc = 16          # content spatial -> Nc = 256
    Hs = Ws = 8           # style spatial   -> Ns = 64

    key = jax.random.PRNGKey(0)
    k1, k2, k3 = jax.random.split(key, 3)
    F_c = jax.random.normal(k1, (b, in_planes, Hc, Wc), jnp.float32)
    F_s = jax.random.normal(k2, (b, in_planes, Hs, Ws), jnp.float32)
    params = _init_params(k3, in_planes)

    out = cross_attn_v8(F_c, F_s, params)
    out = jax.block_until_ready(out)

    ref = jax.block_until_ready(_reference(F_c, F_s, params))
    assert out.shape == (b, in_planes, Hc, Wc)
    # bf16 matmul operands + algebraically-folded convs + approx-reciprocal
    # softmax => ~1e-2-level worst-case differences vs the f32 reference.
    assert jnp.allclose(out, ref, atol=3e-2, rtol=3e-2), "mismatch vs reference"

    print("KERNEL_OK")
</pallas_src>

<mosaic_0001>
module attributes {stable_mosaic.version = 11 : i64} {
  func.func @_cross_attn_kernel(%arg0: i32, %arg1: i32, %arg2: memref<1x32x256xf32, #tpu.memory_space<vmem>>, %arg3: memref<1x32x64xf32, #tpu.memory_space<vmem>>, %arg4: memref<32x65xbf16, #tpu.memory_space<vmem>>, %arg5: memref<1x65xf32, #tpu.memory_space<vmem>>, %arg6: memref<32x1xf32, #tpu.memory_space<vmem>>, %arg7: memref<1x32x256xf32, #tpu.memory_space<vmem>>) attributes {dimension_semantics = [#tpu.dimension_semantics<parallel>, #tpu.dimension_semantics<parallel>], iteration_bounds = array<i64: 2, 1>, scalar_prefetch = 0 : i64, scratch_operands = 0 : i64, tpu.core_type = #tpu.core_type<tc>, window_params = [{transform_indices = @transform_0, window_bounds = array<i64: 1, 32, 256>}, {transform_indices = @transform_1, window_bounds = array<i64: 1, 32, 64>}, {pipeline_mode = #tpu.pipeline_mode<synchronous>, transform_indices = @transform_2, window_bounds = array<i64: 32, 65>}, {pipeline_mode = #tpu.pipeline_mode<synchronous>, transform_indices = @transform_3, window_bounds = array<i64: 1, 65>}, {pipeline_mode = #tpu.pipeline_mode<synchronous>, transform_indices = @transform_4, window_bounds = array<i64: 32, 1>}, {transform_indices = @transform_5, window_bounds = array<i64: 1, 32, 256>}]} {
    %c0 = arith.constant 0 : index
    %c0_0 = arith.constant 0 : index
    %c0_1 = arith.constant 0 : index
    %0 = vector.load %arg3[%c0, %c0_0, %c0_1] : memref<1x32x64xf32, #tpu.memory_space<vmem>>, vector<1x32x64xf32>
    %1 = vector.shape_cast %0 : vector<1x32x64xf32> to vector<32x64xf32>
    %2 = arith.truncf %1 : vector<32x64xf32> to vector<32x64xbf16>
    %c0_2 = arith.constant 0 : index
    %c0_3 = arith.constant 0 : index
    %3 = vector.load %arg4[%c0_2, %c0_3] : memref<32x65xbf16, #tpu.memory_space<vmem>>, vector<32x65xbf16>
    %cst = arith.constant dense<0.000000e+00> : vector<64x65xf32>
    %4 = tpu.matmul %2, %3, %cst {dimension_numbers = #tpu.dot_dimension_numbers<[0], [0], [1], [1], [0, 1, 1, 1], [], []>} : vector<32x64xbf16>, vector<32x65xbf16>, vector<64x65xf32> -> vector<64x65xf32>
    %c0_4 = arith.constant 0 : index
    %c0_5 = arith.constant 0 : index
    %5 = vector.load %arg5[%c0_4, %c0_5] : memref<1x65xf32, #tpu.memory_space<vmem>>, vector<1x65xf32>
    %6 = vector.broadcast %5 : vector<1x65xf32> to vector<64x65xf32>
    %7 = arith.addf %4, %6 : vector<64x65xf32>
    %8 = vector.extract_strided_slice %7 {offsets = [0, 0], sizes = [64, 32], strides = [1, 1]} : vector<64x65xf32> to vector<64x32xf32>
    %9 = arith.truncf %8 : vector<64x32xf32> to vector<64x32xbf16>
    %10 = vector.extract_strided_slice %7 {offsets = [0, 32], sizes = [64, 32], strides = [1, 1]} : vector<64x65xf32> to vector<64x32xf32>
    %11 = arith.truncf %10 : vector<64x32xf32> to vector<64x32xbf16>
    %12 = vector.extract_strided_slice %7 {offsets = [0, 64], sizes = [64, 1], strides = [1, 1]} : vector<64x65xf32> to vector<64x1xf32>
    %c0_6 = arith.constant 0 : index
    %c0_7 = arith.constant 0 : index
    %c0_8 = arith.constant 0 : index
    %13 = vector.load %arg2[%c0_6, %c0_7, %c0_8] : memref<1x32x256xf32, #tpu.memory_space<vmem>>, vector<1x32x256xf32>
    %14 = vector.shape_cast %13 : vector<1x32x256xf32> to vector<32x256xf32>
    %15 = arith.truncf %14 : vector<32x256xf32> to vector<32x256xbf16>
    %cst_9 = arith.constant dense<0.000000e+00> : vector<64x256xf32>
    %16 = tpu.matmul %9, %15, %cst_9 {dimension_numbers = #tpu.dot_dimension_numbers<[1], [0], [0], [1], [0, 0, 1, 1], [], []>} : vector<64x32xbf16>, vector<32x256xbf16>, vector<64x256xf32> -> vector<64x256xf32>
    %17 = vector.broadcast %12 : vector<64x1xf32> to vector<64x256xf32>
    %18 = arith.addf %16, %17 : vector<64x256xf32>
    %cst_10 = arith.constant dense<0xFF800000> : vector<256xf32>
    %19 = vector.multi_reduction <maximumf>, %18, %cst_10 [0] : vector<64x256xf32> to vector<256xf32>
    %20 = vector.shape_cast %19 : vector<256xf32> to vector<1x256xf32>
    %21 = vector.broadcast %20 : vector<1x256xf32> to vector<64x256xf32>
    %22 = arith.subf %18, %21 : vector<64x256xf32>
    %23 = math.exp %22 : vector<64x256xf32>
    %cst_11 = arith.constant dense<0.000000e+00> : vector<256xf32>
    %24 = vector.multi_reduction <add>, %23, %cst_11 [0] : vector<64x256xf32> to vector<256xf32>
    %25 = vector.shape_cast %24 : vector<256xf32> to vector<1x256xf32>
    %26 = tpu.reciprocal %25 {approx = true} : vector<1x256xf32> -> vector<1x256xf32>
    %27 = vector.broadcast %26 : vector<1x256xf32> to vector<64x256xf32>
    %28 = arith.mulf %23, %27 : vector<64x256xf32>
    %29 = arith.truncf %28 : vector<64x256xf32> to vector<64x256xbf16>
    %cst_12 = arith.constant dense<0.000000e+00> : vector<32x256xf32>
    %30 = tpu.matmul %11, %29, %cst_12 {dimension_numbers = #tpu.dot_dimension_numbers<[0], [0], [1], [1], [0, 1, 1, 1], [], []>} : vector<64x32xbf16>, vector<64x256xbf16>, vector<32x256xf32> -> vector<32x256xf32>
    %c0_13 = arith.constant 0 : index
    %c0_14 = arith.constant 0 : index
    %31 = vector.load %arg6[%c0_13, %c0_14] : memref<32x1xf32, #tpu.memory_space<vmem>>, vector<32x1xf32>
    %32 = vector.broadcast %31 : vector<32x1xf32> to vector<32x256xf32>
    %33 = arith.addf %30, %32 : vector<32x256xf32>
    %c0_15 = arith.constant 0 : index
    %c0_16 = arith.constant 0 : index
    %c0_17 = arith.constant 0 : index
    %34 = vector.load %arg7[%c0_15, %c0_16, %c0_17] : memref<1x32x256xf32, #tpu.memory_space<vmem>>, vector<1x32x256xf32>
    %35 = vector.shape_cast %34 : vector<1x32x256xf32> to vector<32x256xf32>
    %36 = vector.shape_cast %33 : vector<32x256xf32> to vector<1x32x256xf32>
    tpu.vector_store %arg7[%c0_15, %c0_16, %c0_17], %36 {strides = array<i32>} : memref<1x32x256xf32, #tpu.memory_space<vmem>>, vector<1x32x256xf32>,
    return
  }
  func.func @transform_0(%arg0: i32, %arg1: i32) -> (i32, i32, i32) {
    %c0_i32 = arith.constant 0 : i32
    %c0_i32_0 = arith.constant 0 : i32
    return %arg0, %c0_i32, %arg1 : i32, i32, i32
  }
  func.func @transform_1(%arg0: i32, %arg1: i32) -> (i32, i32, i32) {
    %c0_i32 = arith.constant 0 : i32
    %c0_i32_0 = arith.constant 0 : i32
    %c0_i32_1 = arith.constant 0 : i32
    return %arg0, %c0_i32, %c0_i32_0 : i32, i32, i32
  }
  func.func @transform_2(%arg0: i32, %arg1: i32) -> (i32, i32) {
    %c0_i32 = arith.constant 0 : i32
    %c0_i32_0 = arith.constant 0 : i32
    %c0_i32_1 = arith.constant 0 : i32
    return %c0_i32, %c0_i32_0 : i32, i32
  }
  func.func @transform_3(%arg0: i32, %arg1: i32) -> (i32, i32) {
    %c0_i32 = arith.constant 0 : i32
    %c0_i32_0 = arith.constant 0 : i32
    %c0_i32_1 = arith.constant 0 : i32
    return %c0_i32, %c0_i32_0 : i32, i32
  }
  func.func @transform_4(%arg0: i32, %arg1: i32) -> (i32, i32) {
    %c0_i32 = arith.constant 0 : i32
    %c0_i32_0 = arith.constant 0 : i32
    %c0_i32_1 = arith.constant 0 : i32
    return %c0_i32, %c0_i32_0 : i32, i32
  }
  func.func @transform_5(%arg0: i32, %arg1: i32) -> (i32, i32, i32) {
    %c0_i32 = arith.constant 0 : i32
    %c0_i32_0 = arith.constant 0 : i32
    return %arg0, %c0_i32, %arg1 : i32, i32, i32
  }
}

</mosaic_0001>

<llo_original>
// kernel: tpu_custom_call.1
$region0: #{tpu_custom_call.1}
  #allocation0 [shape = 'u32[]', space=smem, size = 0x4, offset = 0x4, fixed_abs, tag = 'smem constant byte address 0x4 - core index']
  #allocation1 [shape = 'u32[144,128]{1,0:T(1,128)}', space=vmem, size = 0x12000, scoped, tag = 'internal scratch']
  %s0 = inlined_call_operand.hbm [shape: f32[2,32,256], index: 0, kind: input, shape index: {}]
  %s1 = inlined_call_operand.hbm [shape: f32[2,32,64], index: 1, kind: input, shape index: {}]
  %s2 = inlined_call_operand.vmem [shape: bf16[32,65], index: 2, kind: input, shape index: {}]
  %s3 = inlined_call_operand.vmem [shape: f32[1,65], index: 3, kind: input, shape index: {}]
  %s4 = inlined_call_operand.vmem [shape: f32[32,1], index: 4, kind: input, shape index: {}]
  %s5 = inlined_call_operand.hbm [shape: f32[2,32,256], index: 5, kind: output, shape index: {}]
  %s6 = sld [smem:[#allocation0]]
  $region61: #{tpu_custom_call.1} parent=0
    _
  %s8 = ssub.s32 1, %s6
  %s9 = scalar_select 0, %s8, %s6
  $region1: #{tpu_custom_call.1} parent=0
    #allocation2 [shape = 'u8[65536]{0}', space=vmem, size = 0x10000, scoped, tag = 'input window, operand 0']
    #allocation3 [shape = 's32[2]{0}', space=sflag, size = 0x8, scoped, tag = 'scoped memory for tpu_custom_call.1']
    #allocation4 [shape = 's32[2]{0}', space=sflag, size = 0x8, scoped, tag = 'scoped memory for tpu_custom_call.1']
    #allocation5 [shape = 'u8[32768]{0}', space=vmem, size = 0x8000, scoped, tag = 'input window, operand 1']
    #allocation6 [shape = 's32[2]{0}', space=sflag, size = 0x8, scoped, tag = 'scoped memory for tpu_custom_call.1']
    #allocation7 [shape = 'u8[65536]{0}', space=vmem, size = 0x10000, scoped, tag = 'output window, operand 0']
    %10 = vsyncpa [#allocation3], 0
    %s11 = scalar_lea.sflag [#allocation3], 1
    %12 = vsyncpa %s11, 0
    %13 = vsyncpa [#allocation6], 0
    %s14 = scalar_lea.sflag [#allocation6], 1
    %15 = vsyncpa %s14, 0
    %16 = vsyncpa [#allocation4], 0
    %s17 = scalar_lea.sflag [#allocation4], 1
    %18 = vsyncpa %s17, 0
    loop: start=0, step=1, limit=4
    $region2: #{tpu_custom_call.1} parent=1 // loop_pre_header
      _
    $region3: #{tpu_custom_call.1} parent=1 // loop_header
      %s20 = sphi 0, %s24
      %p21 = scmp.ge.s32.totalorder %s20, 4
      %s27 = sphi 0, %s39
      %s28 = sphi 0, %s35
      %s29 = sphi 0, %s27
      %s30 = sphi 0, %s28
      %s31 = sphi 0, %s29
      %s32 = sphi 0, %s30
      %s44 = sphi 0, %s46
      %s47 = sphi 0, %s44
      %s48 = sphi 0, %s47
      %s64 = sphi 0, %s48
      %s70 = sphi 0, %s72
      %s73 = sphi 0, %s70
      %s74 = sphi 0, %s73
      %s90 = sphi 0, %s74
      %s94 = sphi 0, %s94
      %s96 = sphi 0, %s94
      %s97 = sphi 0, %s96
      %s111 = sphi 0, %s97
      %s115 = sphi 0, %s115
      %s117 = sphi 0, %s115
      %s118 = sphi 0, %s117
      %s132 = sphi 0, %s118
      %s136 = sphi 0, %s136
      %s138 = sphi 0, %s136
      %s139 = sphi 0, %s138
      %s153 = sphi 0, %s139
      %s161 = sphi 0, %s163
      %s164 = sphi 0, %s161
      %s165 = sphi 0, %s164
      %s181 = sphi 0, %s165
    $region4: #{tpu_custom_call.1} parent=1 // loop_header_branch
      %23 = sbr.rel (%p21) target = $region8
    $region5: #{tpu_custom_call.1} parent=1 // loop_body
      %s25 = ssub.s32 %s20, 1
      %s26 = ssub.s32 %s20, 2
      %s33 = sadd.s32 1, %s28
      %p34 = scmp.ge.s32.totalorder %s33, 1
      %s35 = scalar_select %p34, 0, %s33
      %s36 = sadd.s32 1, %s27
      %s37 = scalar_select %p34, %s36, %s27
      %p38 = scmp.ge.s32.totalorder %s37, 2
      %s39 = scalar_select %p38, 0, %s37
      %s40 = ssub.s32 %s27, %s39
      %s41 = ssub.s32 %s28, %s35
      %s42 = sor.u32 %s40, %s41
      %p43 = scmp.eq.s32.totalorder %s42, 0
      %s45 = sadd.s32 %s44, 1
      %s46 = scalar_select %p43, %s44, %s45
      %p49 = pneg %p43
      %p50 = scmp.eq.s32.totalorder %s20, 1
      %p51 = por %p49, %p50
      %p52 = scmp.ne.s32.totalorder %s44, %s47
      %p53 = scmp.eq.s32.totalorder %s20, 0
      %p54 = por %p52, %p53
      %p55 = scmp.ne.s32.totalorder %s44, %s47
      %p56 = scmp.eq.s32.totalorder %s25, 1
      %p57 = por %p55, %p56
      %p58 = scmp.ne.s32.totalorder %s47, %s48
      %p59 = scmp.eq.s32.totalorder %s25, 0
      %p60 = por %p58, %p59
      %p61 = scmp.ne.s32.totalorder %s47, %s48
      %p62 = scmp.eq.s32.totalorder %s26, 1
      %p63 = por %p61, %p62
      %p65 = scmp.ne.s32.totalorder %s48, %s64
      %p66 = scmp.eq.s32.totalorder %s26, 0
      %p67 = por %p65, %p66
      %s68 = ssub.s32 %s27, %s39
      %p69 = scmp.eq.s32.totalorder %s68, 0
      %s71 = sadd.s32 %s70, 1
      %s72 = scalar_select %p69, %s70, %s71
      %p75 = pneg %p69
      %p76 = scmp.eq.s32.totalorder %s20, 1
      %p77 = por %p75, %p76
      %p78 = scmp.ne.s32.totalorder %s70, %s73
      %p79 = scmp.eq.s32.totalorder %s20, 0
      %p80 = por %p78, %p79
      %p81 = scmp.ne.s32.totalorder %s70, %s73
      %p82 = scmp.eq.s32.totalorder %s25, 1
      %p83 = por %p81, %p82
      %p84 = scmp.ne.s32.totalorder %s73, %s74
      %p85 = scmp.eq.s32.totalorder %s25, 0
      %p86 = por %p84, %p85
      %p87 = scmp.ne.s32.totalorder %s73, %s74
      %p88 = scmp.eq.s32.totalorder %s26, 1
      %p89 = por %p87, %p88
      %p91 = scmp.ne.s32.totalorder %s74, %s90
      %p92 = scmp.eq.s32.totalorder %s26, 0
      %p93 = por %p91, %p92
      %s95 = sadd.s32 %s94, 1
      %p98 = scmp.eq.s32.totalorder %s20, 1
      %p99 = scmp.ne.s32.totalorder %s94, %s96
      %p100 = scmp.eq.s32.totalorder %s20, 0
      %p101 = por %p99, %p100
      %p102 = scmp.ne.s32.totalorder %s94, %s96
      %p103 = scmp.eq.s32.totalorder %s25, 1
      %p104 = por %p102, %p103
      %p105 = scmp.ne.s32.totalorder %s96, %s97
      %p106 = scmp.eq.s32.totalorder %s25, 0
      %p107 = por %p105, %p106
      %p108 = scmp.ne.s32.totalorder %s96, %s97
      %p109 = scmp.eq.s32.totalorder %s26, 1
      %p110 = por %p108, %p109
      %p112 = scmp.ne.s32.totalorder %s97, %s111
      %p113 = scmp.eq.s32.totalorder %s26, 0
      %p114 = por %p112, %p113
      %s116 = sadd.s32 %s115, 1
      %p119 = scmp.eq.s32.totalorder %s20, 1
      %p120 = scmp.ne.s32.totalorder %s115, %s117
      %p121 = scmp.eq.s32.totalorder %s20, 0
      %p122 = por %p120, %p121
      %p123 = scmp.ne.s32.totalorder %s115, %s117
      %p124 = scmp.eq.s32.totalorder %s25, 1
      %p125 = por %p123, %p124
      %p126 = scmp.ne.s32.totalorder %s117, %s118
      %p127 = scmp.eq.s32.totalorder %s25, 0
      %p128 = por %p126, %p127
      %p129 = scmp.ne.s32.totalorder %s117, %s118
      %p130 = scmp.eq.s32.totalorder %s26, 1
      %p131 = por %p129, %p130
      %p133 = scmp.ne.s32.totalorder %s118, %s132
      %p134 = scmp.eq.s32.totalorder %s26, 0
      %p135 = por %p133, %p134
      %s137 = sadd.s32 %s136, 1
      %p140 = scmp.eq.s32.totalorder %s20, 1
      %p141 = scmp.ne.s32.totalorder %s136, %s138
      %p142 = scmp.eq.s32.totalorder %s20, 0
      %p143 = por %p141, %p142
      %p144 = scmp.ne.s32.totalorder %s136, %s138
      %p145 = scmp.eq.s32.totalorder %s25, 1
      %p146 = por %p144, %p145
      %p147 = scmp.ne.s32.totalorder %s138, %s139
      %p148 = scmp.eq.s32.totalorder %s25, 0
      %p149 = por %p147, %p148
      %p150 = scmp.ne.s32.totalorder %s138, %s139
      %p151 = scmp.eq.s32.totalorder %s26, 1
      %p152 = por %p150, %p151
      %p154 = scmp.ne.s32.totalorder %s139, %s153
      %p155 = scmp.eq.s32.totalorder %s26, 0
      %p156 = por %p154, %p155
      %s157 = ssub.s32 %s27, %s39
      %s158 = ssub.s32 %s28, %s35
      %s159 = sor.u32 %s157, %s158
      %p160 = scmp.eq.s32.totalorder %s159, 0
      %s162 = sadd.s32 %s161, 1
      %s163 = scalar_select %p160, %s161, %s162
      %p166 = pneg %p160
      %p167 = scmp.eq.s32.totalorder %s20, 1
      %p168 = por %p166, %p167
      %p169 = scmp.ne.s32.totalorder %s161, %s164
      %p170 = scmp.eq.s32.totalorder %s20, 0
      %p171 = por %p169, %p170
      %p172 = scmp.ne.s32.totalorder %s161, %s164
      %p173 = scmp.eq.s32.totalorder %s25, 1
      %p174 = por %p172, %p173
      %p175 = scmp.ne.s32.totalorder %s164, %s165
      %p176 = scmp.eq.s32.totalorder %s25, 0
      %p177 = por %p175, %p176
      %p178 = scmp.ne.s32.totalorder %s164, %s165
      %p179 = scmp.eq.s32.totalorder %s26, 1
      %p180 = por %p178, %p179
      %p182 = scmp.ne.s32.totalorder %s165, %s181
      %p183 = scmp.eq.s32.totalorder %s26, 0
      %p184 = por %p182, %p183
      %p185 = scmp.le.s32.totalorder 1, %s20
      %p186 = scmp.lt.s32.totalorder %s20, 3
      %p187 = pnand %p185, %p186
      %p188 = pneg %p187
      // Predicated region
      $region9: #{tpu_custom_call.1} parent=5 // pred_check
        _
      $region10: #{tpu_custom_call.1} parent=5 // pred_check_branch
        %190 = sbr.rel (%p187) target = $region12
      $region11: #{tpu_custom_call.1} parent=5 // pred_region
        %s191 = ssub.s32 %s20, 1
        // Predicated region
        $region13: #{tpu_custom_call.1} parent=11 // pred_check
          %p192 = pneg %p107
        $region14: #{tpu_custom_call.1} parent=11 // pred_check_branch
          %194 = sbr.rel (%p192) target = $region16
        $region15: #{tpu_custom_call.1} parent=11 // pred_region
          _
        $region16: #{tpu_custom_call.1} parent=11 // pred_fallthru
          _
        // Predicated region
        $region17: #{tpu_custom_call.1} parent=11 // pred_check
          %p195 = pneg %p128
        $region18: #{tpu_custom_call.1} parent=11 // pred_check_branch
          %197 = sbr.rel (%p195) target = $region20
        $region19: #{tpu_custom_call.1} parent=11 // pred_region
          _
        $region20: #{tpu_custom_call.1} parent=11 // pred_fallthru
          _
        // Predicated region
        $region21: #{tpu_custom_call.1} parent=11 // pred_check
          %p198 = pneg %p149
        $region22: #{tpu_custom_call.1} parent=11 // pred_check_branch
          %200 = sbr.rel (%p198) target = $region24
        $region23: #{tpu_custom_call.1} parent=11 // pred_region
          _
        $region24: #{tpu_custom_call.1} parent=11 // pred_fallthru
          _
      $region12: #{tpu_custom_call.1} parent=5 // pred_fallthru
        _
      %p201 = scmp.lt.s32.totalorder %s20, 2
      // Predicated region
      $region25: #{tpu_custom_call.1} parent=5 // pred_check
        %p202 = pneg %p201
      $region26: #{tpu_custom_call.1} parent=5 // pred_check_branch
        %204 = sbr.rel (%p202) target = $region28
      $region27: #{tpu_custom_call.1} parent=5 // pred_region
        // Predicated region
        $region29: #{tpu_custom_call.1} parent=27 // pred_check
          %p205 = pneg %p54
        $region30: #{tpu_custom_call.1} parent=27 // pred_check_branch
          %207 = sbr.rel (%p205) target = $region32
        $region31: #{tpu_custom_call.1} parent=27 // pred_region
          %s208 = sand.u32 %s44, 1
          %s209 = scalar_lea.sflag [#allocation3], %s208
          %s210 = sand.u32 %s44, 1
          %s211 = smul.addr %s210, 64
          %s212 = scalar_lea.vmem [#allocation2], %s211
          %s213 = smul.u32 2, %s28
          %s215 = ssub.s32 1024, 1024
          %216 = vsyncadd %s209, %s215
          %s217 = smul.addr %s27, 8
          %s218 = sadd.s32 %s213, %s217
          %s219 = smul.addr %s218, 128
          %s220 = scalar_lea.hbm %s0, %s219
          %s221 = sshll.u32 %s212, 4
          %s222 = int_to_ptr.vmem [resolvable:$true] %s221
          %227 = dma.hbm_to_vmem [thread:$0]  %s220, 1024, %s222, %s209, 256, 256, 16
        $region32: #{tpu_custom_call.1} parent=27 // pred_fallthru
          _
        // Predicated region
        $region33: #{tpu_custom_call.1} parent=27 // pred_check
          %p228 = pneg %p80
        $region34: #{tpu_custom_call.1} parent=27 // pred_check_branch
          %230 = sbr.rel (%p228) target = $region36
        $region35: #{tpu_custom_call.1} parent=27 // pred_region
          %s231 = sand.u32 %s70, 1
          %s232 = scalar_lea.sflag [#allocation6], %s231
          %s233 = sand.u32 %s70, 1
          %s234 = smul.addr %s233, 32
          %s235 = scalar_lea.vmem [#allocation5], %s234
          %s237 = ssub.s32 512, 512
          %238 = vsyncadd %s232, %s237
          %s239 = smul.addr %s27, 4
          %s240 = smul.addr %s239, 128
          %s241 = scalar_lea.hbm %s1, %s240
          %s242 = sshll.u32 %s235, 4
          %s243 = int_to_ptr.vmem [resolvable:$true] %s242
          %248 = dma.hbm_to_vmem [thread:$0]  %s241, 512, %s243, %s232, 128, 128, 8
        $region36: #{tpu_custom_call.1} parent=27 // pred_fallthru
          _
      $region28: #{tpu_custom_call.1} parent=5 // pred_fallthru
        _
      %p249 = scmp.le.s32.totalorder 1, %s20
      %p250 = scmp.lt.s32.totalorder %s20, 3
      %p251 = pnand %p249, %p250
      %p252 = pneg %p251
      // Predicated region
      $region37: #{tpu_custom_call.1} parent=5 // pred_check
        _
      $region38: #{tpu_custom_call.1} parent=5 // pred_check_branch
        %254 = sbr.rel (%p251) target = $region40
      $region39: #{tpu_custom_call.1} parent=5 // pred_region
        %s255 = ssub.s32 %s20, 1
        %s256 = sand.u32 %s47, 1
        %s257 = scalar_lea.sflag [#allocation3], %s256
        %s258 = sand.u32 %s47, 1
        %s259 = smul.addr %s258, 64
        %s260 = scalar_lea.vmem [#allocation2], %s259
        // Predicated region
        $region41: #{tpu_custom_call.1} parent=39 // pred_check
          %p261 = pneg %p60
        $region42: #{tpu_custom_call.1} parent=39 // pred_check_branch
          %263 = sbr.rel (%p261) target = $region44
        $region43: #{tpu_custom_call.1} parent=39 // pred_region
          %264 = dma.done %s257, 1024
        $region44: #{tpu_custom_call.1} parent=39 // pred_fallthru
          _
        %s265 = sand.u32 %s73, 1
        %s266 = scalar_lea.sflag [#allocation6], %s265
        %s267 = sand.u32 %s73, 1
        %s268 = smul.addr %s267, 32
        %s269 = scalar_lea.vmem [#allocation5], %s268
        // Predicated region
        $region45: #{tpu_custom_call.1} parent=39 // pred_check
          %p270 = pneg %p86
        $region46: #{tpu_custom_call.1} parent=39 // pred_check_branch
          %272 = sbr.rel (%p270) target = $region48
        $region47: #{tpu_custom_call.1} parent=39 // pred_region
          %273 = dma.done %s266, 512
        $region48: #{tpu_custom_call.1} parent=39 // pred_fallthru
          _
        %s274 = sand.u32 %s47, 1
        %s275 = scalar_lea.sflag [#allocation3], %s274
        %s276 = sand.u32 %s47, 1
        %s277 = smul.addr %s276, 64
        %s278 = scalar_lea.vmem [#allocation2], %s277
        %p279 = pneg %p60
        %p280 = pneg %p57
        %s281 = sand.u32 %s73, 1
        %s282 = scalar_lea.sflag [#allocation6], %s281
        %s283 = sand.u32 %s73, 1
        %s284 = smul.addr %s283, 32
        %s285 = scalar_lea.vmem [#allocation5], %s284
        %p286 = pneg %p86
        %p287 = pneg %p83
        %p288 = pneg %p107
        %p289 = pneg %p104
        %p290 = pneg %p128
        %p291 = pneg %p125
        %p292 = pneg %p149
        %p293 = pneg %p146
        %p294 = pneg %p177
        %p295 = pneg %p174
        %s296 = sand.u32 %s164, 1
        %s297 = scalar_lea.sflag [#allocation4], %s296
        %s298 = sand.u32 %s164, 1
        %s299 = smul.addr %s298, 64
        %s300 = scalar_lea.vmem [#allocation7], %s299
        %s301 = smul.u32 2, %s30
        %s302 = smul.u32 2, %s30
        %v304 = vld [vmem:[%s269] sm:$0xff]
        %v305 = vld [vmem:[%s269 + $0x8] sm:$0xff]
        %v306 = vld [vmem:[%s269 + $0x10] sm:$0xff]
        %v307 = vld [vmem:[%s269 + $0x18] sm:$0xff]
        %v308 = vpack.c.bf16 %v305, %v304
        %v309 = vpack.c.bf16 %v307, %v306
        %v310 = vld [vmem:[%s2] sm:$0xf]
        %v311 = vld [vmem:[%s2 + $0x4] sm:$0xf]
        %v312 = vld [vmem:[%s2 + $0x8] sm:$0xf]
        %v313 = vld [vmem:[%s2 + $0xc] sm:$0xf]
        %v314 = vld [vmem:[%s3] sm:$0x1]
        %v316 = vlaneseq
        %v317 = vshrl.u32 %v316, 7
        %v318 = vsub.s32 0, %v317
        %v319 = vrot.slane %v314, %v318
        %321 = vxpose.xlu0.c.b16.start [1/8] %v308, 128
        %322 = vxpose.xlu0.c.b16.cont [2/8] %v309, 128
        %323 = vxpose.xlu0.c.b16.cont [3/8] 0, 128
        %324 = vxpose.xlu0.c.b16.cont [4/8] 0, 128
        %325 = vxpose.xlu0.c.b16.cont [5/8] 0, 128
        %326 = vxpose.xlu0.c.b16.cont [6/8] 0, 128
        %327 = vxpose.xlu0.c.b16.cont [7/8] 0, 128
        %328 = vxpose.xlu0.c.b16.end [8/8] 0, 128
        %v329 = vpop.trf.xlu0
        %v330 = vpop.trf.xlu0
        %v331 = vpop.trf.xlu0
        %v332 = vpop.trf.xlu0
        %v333 = vpop.trf.xlu0
        %v334 = vpop.trf.xlu0
        %v335 = vpop.trf.xlu0
        %v336 = vpop.trf.xlu0
        %v341 = vunpack.c.l.b16 %v310
        %v342 = vunpack.c.l.b16 %v311
        %v343 = vunpack.c.l.b16 %v312
        %v344 = vunpack.c.l.b16 %v313
        %v345 = vpack.c.b16 %v342, %v341
        %v346 = vpack.c.b16 %v344, %v343
        %vm349 = vcmask 261120
        %v351 = vsel %vm349, %v329, 0
        %v354 = vsel %vm349, %v330, 0
        %v357 = vsel %vm349, %v331, 0
        %v360 = vsel %vm349, %v332, 0
        %362 = vmatprep.subr.bf16.mxu0 0
        %363 = vmatpush1.bf16.msra.mxu0 0
        %364 = vmatprep.subr.bf16.mxu0 0
        %365 = vmatpush1.bf16.msra.mxu0 0
        %366 = vmatprep.subr.bf16.mxu0 0
        %367 = vmatpush1.bf16.msra.mxu0 0
        %368 = vmatprep.subr.bf16.mxu0 0
        %369 = vmatpush1.bf16.msra.mxu0 0
        %370 = vmatprep.subr.bf16.mxu0 0
        %371 = vmatpush1.bf16.msra.mxu0 0
        %372 = vmatprep.subr.bf16.mxu0 0
        %373 = vmatpush1.bf16.msra.mxu0 0
        %374 = vmatprep.subr.bf16.mxu0 0
        %375 = vmatpush1.bf16.msra.mxu0 %v346
        %376 = vmatprep.subr.bf16.mxu0 0
        %377 = vmatpush1.bf16.msra.mxu0 %v345
        %378 = vmatprep.subr.bf16.mxu0 0
        %379 = vmatpush2.bf16.msra.mxu0 0
        %380 = vmatprep.subr.bf16.mxu0 0
        %381 = vmatpush2.bf16.msra.mxu0 0
        %382 = vmatprep.subr.bf16.mxu0 0
        %383 = vmatpush2.bf16.msra.mxu0 0
        %384 = vmatprep.subr.bf16.mxu0 0
        %385 = vmatpush2.bf16.msra.mxu0 0
        %386 = vmatprep.subr.bf16.mxu0 0
        %387 = vmatpush2.bf16.msra.mxu0 0
        %388 = vmatprep.subr.bf16.mxu0 0
        %389 = vmatpush2.bf16.msra.mxu0 0
        %390 = vmatprep.subr.bf16.mxu0 0
        %391 = vmatpush2.bf16.msra.mxu0 0
        %392 = vmatprep.subr.bf16.mxu0 0
        %393 = vmatpush2.bf16.msra.mxu0 0
        %394 = vmatprep.mubr.bf16.mxu0 0
        %395 = vmatmul.mubr.bf16.gmra.mxu0 %v351
        %v396 = vpop.f32.mrf.mxu0
        %v397 = vadd.f32 %v319, %v396
        %v398 = vpop.f32.mrf.mxu0
        %v399 = vpop.f32.mrf.mxu0
        %v400 = vadd.f32 %v319, %v399
        %v401 = vpop.f32.mrf.mxu0
        %402 = vmatprep.mubr.bf16.mxu0 0
        %403 = vmatmul.mubr.bf16.gmra.mxu0 %v354
        %v404 = vpop.f32.mrf.mxu0
        %v405 = vadd.f32 %v319, %v404
        %v406 = vpop.f32.mrf.mxu0
        %v407 = vpop.f32.mrf.mxu0
        %v408 = vadd.f32 %v319, %v407
        %v409 = vpop.f32.mrf.mxu0
        %410 = vmatprep.mubr.bf16.mxu0 0
        %411 = vmatmul.mubr.bf16.gmra.mxu0 %v357
        %v412 = vpop.f32.mrf.mxu0
        %v413 = vadd.f32 %v319, %v412
        %v414 = vpop.f32.mrf.mxu0
        %v415 = vpop.f32.mrf.mxu0
        %v416 = vadd.f32 %v319, %v415
        %v417 = vpop.f32.mrf.mxu0
        %418 = vmatprep.mubr.bf16.mxu0 0
        %419 = vmatmul.mubr.bf16.gmra.mxu0 %v360
        %v420 = vpop.f32.mrf.mxu0
        %v421 = vadd.f32 %v319, %v420
        %v422 = vpop.f32.mrf.mxu0
        %v423 = vpop.f32.mrf.mxu0
        %v424 = vadd.f32 %v319, %v423
        %v425 = vpop.f32.mrf.mxu0
        %426 = vdwg.mxu0
        %v427 = vpack.c.bf16 %v400, %v397
        %v428 = vpack.c.bf16 %v408, %v405
        %v429 = vpack.c.bf16 %v416, %v413
        %v430 = vpack.c.bf16 %v424, %v421
        %v431 = vld [vmem:[%s260] sm:$0xff]
        %v432 = vld [vmem:[%s260 + $0x8] sm:$0xff]
        %v433 = vld [vmem:[%s260 + $0x10] sm:$0xff]
        %v434 = vld [vmem:[%s260 + $0x18] sm:$0xff]
        %v435 = vld [vmem:[%s260 + $0x20] sm:$0xff]
        %v436 = vld [vmem:[%s260 + $0x28] sm:$0xff]
        %v437 = vld [vmem:[%s260 + $0x30] sm:$0xff]
        %v438 = vld [vmem:[%s260 + $0x38] sm:$0xff]
        %v439 = vpack.c.bf16 %v433, %v431
        %v440 = vpack.c.bf16 %v434, %v432
        %v441 = vpack.c.bf16 %v437, %v435
        %v442 = vpack.c.bf16 %v438, %v436
        %444 = vset.pattern.permute.xlu0 64
        %445 = vperm.xlu0 %444, %v397
        %v446 = vpop.permute.xlu0 %445
        %449 = vset.pattern.permute.xlu0 64
        %450 = vperm.xlu0 %449, %v400
        %v451 = vpop.permute.xlu0 %450
        %454 = vset.pattern.permute.xlu0 64
        %455 = vperm.xlu0 %454, %v405
        %v456 = vpop.permute.xlu0 %455
        %459 = vset.pattern.permute.xlu0 64
        %460 = vperm.xlu0 %459, %v408
        %v461 = vpop.permute.xlu0 %460
        %464 = vset.pattern.permute.xlu0 64
        %465 = vperm.xlu0 %464, %v413
        %v466 = vpop.permute.xlu0 %465
        %469 = vset.pattern.permute.xlu0 64
        %470 = vperm.xlu0 %469, %v416
        %v471 = vpop.permute.xlu0 %470
        %474 = vset.pattern.permute.xlu0 64
        %475 = vperm.xlu0 %474, %v421
        %v476 = vpop.permute.xlu0 %475
        %479 = vset.pattern.permute.xlu0 64
        %480 = vperm.xlu0 %479, %v424
        %v481 = vpop.permute.xlu0 %480
        %v484 = vsel %vm349, %v427, 0
        %v487 = vsel %vm349, %v428, 0
        %v490 = vsel %vm349, %v429, 0
        %v493 = vsel %vm349, %v430, 0
        %495 = vmatprep.subr.bf16.mxu0 0
        %496 = vmatpush1.bf16.msra.mxu0 0
        %497 = vmatprep.subr.bf16.mxu0 0
        %498 = vmatpush1.bf16.msra.mxu0 0
        %499 = vmatprep.subr.bf16.mxu0 0
        %500 = vmatpush1.bf16.msra.mxu0 0
        %501 = vmatprep.subr.bf16.mxu0 0
        %502 = vmatpush1.bf16.msra.mxu0 0
        %503 = vmatprep.subr.bf16.mxu0 0
        %504 = vmatpush1.bf16.msra.mxu0 0
        %505 = vmatprep.subr.bf16.mxu0 0
        %506 = vmatpush1.bf16.msra.mxu0 0
        %507 = vmatprep.subr.bf16.mxu0 %v442
        %508 = vmatpush1.bf16.msra.mxu0 %v441
        %509 = vmatprep.subr.bf16.mxu0 %v440
        %510 = vmatpush1.bf16.msra.mxu0 %v439
        %511 = vmatprep.subr.bf16.mxu0 0
        %512 = vmatpush2.bf16.msra.mxu0 0
        %513 = vmatprep.subr.bf16.mxu0 0
        %514 = vmatpush2.bf16.msra.mxu0 0
        %515 = vmatprep.subr.bf16.mxu0 0
        %516 = vmatpush2.bf16.msra.mxu0 0
        %517 = vmatprep.subr.bf16.mxu0 0
        %518 = vmatpush2.bf16.msra.mxu0 0
        %519 = vmatprep.subr.bf16.mxu0 0
        %520 = vmatpush2.bf16.msra.mxu0 0
        %521 = vmatprep.subr.bf16.mxu0 0
        %522 = vmatpush2.bf16.msra.mxu0 0
        %523 = vmatprep.subr.bf16.mxu0 0
        %524 = vmatpush2.bf16.msra.mxu0 0
        %525 = vmatprep.subr.bf16.mxu0 0
        %526 = vmatpush2.bf16.msra.mxu0 0
        %527 = vmatprep.mubr.bf16.mxu0 0
        %528 = vmatmul.mubr.bf16.gmra.mxu0 %v484
        %v529 = vpop.f32.mrf.mxu0
        %v530 = vadd.f32 %v446, %v529
        %v531 = vpop.f32.mrf.mxu0
        %v532 = vadd.f32 %v446, %v531
        %v533 = vpop.f32.mrf.mxu0
        %v534 = vadd.f32 %v451, %v533
        %v535 = vpop.f32.mrf.mxu0
        %v536 = vadd.f32 %v451, %v535
        %537 = vmatprep.mubr.bf16.mxu0 0
        %538 = vmatmul.mubr.bf16.gmra.mxu0 %v487
        %v539 = vpop.f32.mrf.mxu0
        %v540 = vadd.f32 %v456, %v539
        %v541 = vpop.f32.mrf.mxu0
        %v542 = vadd.f32 %v456, %v541
        %v543 = vpop.f32.mrf.mxu0
        %v544 = vadd.f32 %v461, %v543
        %v545 = vpop.f32.mrf.mxu0
        %v546 = vadd.f32 %v461, %v545
        %547 = vmatprep.mubr.bf16.mxu0 0
        %548 = vmatmul.mubr.bf16.gmra.mxu0 %v490
        %v549 = vpop.f32.mrf.mxu0
        %v550 = vadd.f32 %v466, %v549
        %v551 = vpop.f32.mrf.mxu0
        %v552 = vadd.f32 %v466, %v551
        %v553 = vpop.f32.mrf.mxu0
        %v554 = vadd.f32 %v471, %v553
        %v555 = vpop.f32.mrf.mxu0
        %v556 = vadd.f32 %v471, %v555
        %557 = vmatprep.mubr.bf16.mxu0 0
        %558 = vmatmul.mubr.bf16.gmra.mxu0 %v493
        %v559 = vpop.f32.mrf.mxu0
        %v560 = vadd.f32 %v476, %v559
        %v561 = vpop.f32.mrf.mxu0
        %v562 = vadd.f32 %v476, %v561
        %v563 = vpop.f32.mrf.mxu0
        %v564 = vadd.f32 %v481, %v563
        %v565 = vpop.f32.mrf.mxu0
        %v566 = vadd.f32 %v481, %v565
        %567 = vdwg.mxu0
        %v568 = vmax.f32 %v530, %v540
        %v569 = vmax.f32 %v534, %v544
        %v570 = vmax.f32 %v568, %v550
        %v571 = vmax.f32 %v569, %v554
        %v572 = vmax.f32 %v570, %v560
        %v573 = vmax.f32 %v571, %v564
        %v574 = vmax.f32 %v572, %v573
        %v575 = vrot.slane %v574, 4
        %v576 = vmax.f32 %v574, %v575
        %v577 = vrot.slane %v576, 2
        %v578 = vmax.f32 %v576, %v577
        %v579 = vrot.slane %v578, 1
        %v580 = vmax.f32 %v578, %v579
        %v581 = vmax.f32 %v532, %v542
        %v582 = vmax.f32 %v536, %v546
        %v583 = vmax.f32 %v581, %v552
        %v584 = vmax.f32 %v582, %v556
        %v585 = vmax.f32 %v583, %v562
        %v586 = vmax.f32 %v584, %v566
        %v587 = vmax.f32 %v585, %v586
        %v588 = vrot.slane %v587, 4
        %v589 = vmax.f32 %v587, %v588
        %v590 = vrot.slane %v589, 2
        %v591 = vmax.f32 %v589, %v590
        %v592 = vrot.slane %v591, 1
        %v593 = vmax.f32 %v591, %v592
        %v594 = vsub.f32 %v530, %v580
        %v595 = vsub.f32 %v532, %v593
        %v596 = vsub.f32 %v534, %v580
        %v597 = vsub.f32 %v536, %v593
        %v598 = vsub.f32 %v540, %v580
        %v599 = vsub.f32 %v542, %v593
        %v600 = vsub.f32 %v544, %v580
        %v601 = vsub.f32 %v546, %v593
        %v602 = vsub.f32 %v550, %v580
        %v603 = vsub.f32 %v552, %v593
        %v604 = vsub.f32 %v554, %v580
        %v605 = vsub.f32 %v556, %v593
        %v606 = vsub.f32 %v560, %v580
        %v607 = vsub.f32 %v562, %v593
        %v608 = vsub.f32 %v564, %v580
        %v609 = vsub.f32 %v566, %v593
        %v610 = vmul.f32 %v594, 1.442695
        %v611 = vpow.pop %v610
        %v612 = vmul.f32 %v595, 1.442695
        %v613 = vpow.pop %v612
        %v614 = vmul.f32 %v596, 1.442695
        %v615 = vpow.pop %v614
        %v616 = vmul.f32 %v597, 1.442695
        %v617 = vpow.pop %v616
        %v618 = vmul.f32 %v598, 1.442695
        %v619 = vpow.pop %v618
        %v620 = vmul.f32 %v599, 1.442695
        %v621 = vpow.pop %v620
        %v622 = vmul.f32 %v600, 1.442695
        %v623 = vpow.pop %v622
        %v624 = vmul.f32 %v601, 1.442695
        %v625 = vpow.pop %v624
        %v626 = vmul.f32 %v602, 1.442695
        %v627 = vpow.pop %v626
        %v628 = vmul.f32 %v603, 1.442695
        %v629 = vpow.pop %v628
        %v630 = vmul.f32 %v604, 1.442695
        %v631 = vpow.pop %v630
        %v632 = vmul.f32 %v605, 1.442695
        %v633 = vpow.pop %v632
        %v634 = vmul.f32 %v606, 1.442695
        %v635 = vpow.pop %v634
        %v636 = vmul.f32 %v607, 1.442695
        %v637 = vpow.pop %v636
        %v638 = vmul.f32 %v608, 1.442695
        %v639 = vpow.pop %v638
        %v640 = vmul.f32 %v609, 1.442695
        %v641 = vpow.pop %v640
        %v642 = vadd.f32 %v611, %v615
        %v643 = vadd.f32 %v642, %v619
        %v644 = vadd.f32 %v643, %v623
        %v645 = vadd.f32 %v644, %v627
        %v646 = vadd.f32 %v645, %v631
        %v647 = vadd.f32 %v646, %v635
        %v648 = vadd.f32 %v647, %v639
        %v649 = vrot.slane %v648, 4
        %v650 = vadd.f32 %v648, %v649
        %v651 = vrot.slane %v650, 2
        %v652 = vadd.f32 %v650, %v651
        %v653 = vrot.slane %v652, 1
        %v654 = vadd.f32 %v652, %v653
        %v655 = vadd.f32 %v613, %v617
        %v656 = vadd.f32 %v655, %v621
        %v657 = vadd.f32 %v656, %v625
        %v658 = vadd.f32 %v657, %v629
        %v659 = vadd.f32 %v658, %v633
        %v660 = vadd.f32 %v659, %v637
        %v661 = vadd.f32 %v660, %v641
        %v662 = vrot.slane %v661, 4
        %v663 = vadd.f32 %v661, %v662
        %v664 = vrot.slane %v663, 2
        %v665 = vadd.f32 %v663, %v664
        %v666 = vrot.slane %v665, 1
        %v667 = vadd.f32 %v665, %v666
        %v668 = vrcp.pop %v654
        %v669 = vrcp.pop %v667
        %v670 = vmul.f32 %v611, %v668
        %v671 = vmul.f32 %v613, %v669
        %v672 = vmul.f32 %v615, %v668
        %v673 = vmul.f32 %v617, %v669
        %v674 = vmul.f32 %v619, %v668
        %v675 = vmul.f32 %v621, %v669
        %v676 = vmul.f32 %v623, %v668
        %v677 = vmul.f32 %v625, %v669
        %v678 = vmul.f32 %v627, %v668
        %v679 = vmul.f32 %v629, %v669
        %v680 = vmul.f32 %v631, %v668
        %v681 = vmul.f32 %v633, %v669
        %v682 = vmul.f32 %v635, %v668
        %v683 = vmul.f32 %v637, %v669
        %v684 = vmul.f32 %v639, %v668
        %v685 = vmul.f32 %v641, %v669
        %v686 = vpack.c.bf16 %v672, %v670
        %v687 = vpack.c.bf16 %v673, %v671
        %v688 = vpack.c.bf16 %v676, %v674
        %v689 = vpack.c.bf16 %v677, %v675
        %v690 = vpack.c.bf16 %v680, %v678
        %v691 = vpack.c.bf16 %v681, %v679
        %v692 = vpack.c.bf16 %v684, %v682
        %v693 = vpack.c.bf16 %v685, %v683
        %v694 = vld [vmem:[%s4] sm:$0xff]
        %v695 = vld [vmem:[%s4 + $0x8] sm:$0xff]
        %v696 = vld [vmem:[%s4 + $0x10] sm:$0xff]
        %v697 = vld [vmem:[%s4 + $0x18] sm:$0xff]
        %699 = vset.pattern.permute.xlu0 0
        %700 = vperm.xlu0 %699, %v694
        %v701 = vpop.permute.xlu0 %700
        %704 = vset.pattern.permute.xlu0 0
        %705 = vperm.xlu0 %704, %v695
        %v706 = vpop.permute.xlu0 %705
        %709 = vset.pattern.permute.xlu0 0
        %710 = vperm.xlu0 %709, %v696
        %v711 = vpop.permute.xlu0 %710
        %714 = vset.pattern.permute.xlu0 0
        %715 = vperm.xlu0 %714, %v697
        %v716 = vpop.permute.xlu0 %715
        %722 = vrot.lane.b32.xlu0 %v427, 96
        %v723 = vpop.permute.xlu0 %722
        %724 = vrot.lane.b32.xlu0 %v428, 96
        %v725 = vpop.permute.xlu0 %724
        %726 = vrot.lane.b32.xlu0 %v429, 96
        %v727 = vpop.permute.xlu0 %726
        %728 = vrot.lane.b32.xlu0 %v430, 96
        %v729 = vpop.permute.xlu0 %728
        %734 = vxpose.xlu0.c.b16.start [1/8] %v723, 128
        %735 = vxpose.xlu0.c.b16.cont [2/8] %v725, 128
        %736 = vxpose.xlu0.c.b16.cont [3/8] %v727, 128
        %737 = vxpose.xlu0.c.b16.cont [4/8] %v729, 128
        %738 = vxpose.xlu0.c.b16.cont [5/8] 0, 128
        %739 = vxpose.xlu0.c.b16.cont [6/8] 0, 128
        %740 = vxpose.xlu0.c.b16.cont [7/8] 0, 128
        %741 = vxpose.xlu0.c.b16.end [8/8] 0, 128
        %v742 = vpop.trf.xlu0
        %v743 = vpop.trf.xlu0
        %v744 = vpop.trf.xlu0
        %v745 = vpop.trf.xlu0
        %v746 = vpop.trf.xlu0
        %v747 = vpop.trf.xlu0
        %v748 = vpop.trf.xlu0
        %v749 = vpop.trf.xlu0
        %vm750 = vcmask 523264
        %v752 = vsel %vm750, %v742, 0
        %v755 = vsel %vm750, %v743, 0
        %757 = vmatprep.subr.bf16.mxu0 0
        %758 = vmatpush1.bf16.msra.mxu0 0
        %759 = vmatprep.subr.bf16.mxu0 0
        %760 = vmatpush1.bf16.msra.mxu0 0
        %761 = vmatprep.subr.bf16.mxu0 0
        %762 = vmatpush1.bf16.msra.mxu0 0
        %763 = vmatprep.subr.bf16.mxu0 0
        %764 = vmatpush1.bf16.msra.mxu0 0
        %765 = vmatprep.subr.bf16.mxu0 %v693
        %766 = vmatpush1.bf16.msra.mxu0 %v692
        %767 = vmatprep.subr.bf16.mxu0 %v691
        %768 = vmatpush1.bf16.msra.mxu0 %v690
        %769 = vmatprep.subr.bf16.mxu0 %v689
        %770 = vmatpush1.bf16.msra.mxu0 %v688
        %771 = vmatprep.subr.bf16.mxu0 %v687
        %772 = vmatpush1.bf16.msra.mxu0 %v686
        %773 = vmatprep.subr.bf16.mxu0 0
        %774 = vmatpush2.bf16.msra.mxu0 0
        %775 = vmatprep.subr.bf16.mxu0 0
        %776 = vmatpush2.bf16.msra.mxu0 0
        %777 = vmatprep.subr.bf16.mxu0 0
        %778 = vmatpush2.bf16.msra.mxu0 0
        %779 = vmatprep.subr.bf16.mxu0 0
        %780 = vmatpush2.bf16.msra.mxu0 0
        %781 = vmatprep.subr.bf16.mxu0 0
        %782 = vmatpush2.bf16.msra.mxu0 0
        %783 = vmatprep.subr.bf16.mxu0 0
        %784 = vmatpush2.bf16.msra.mxu0 0
        %785 = vmatprep.subr.bf16.mxu0 0
        %786 = vmatpush2.bf16.msra.mxu0 0
        %787 = vmatprep.subr.bf16.mxu0 0
        %788 = vmatpush2.bf16.msra.mxu0 0
        %789 = vmatprep.mubr.bf16.mxu0 0
        %790 = vmatmul.mubr.bf16.gmra.mxu0 %v752
        %v791 = vpop.f32.mrf.mxu0
        %v792 = vadd.f32 %v701, %v791
        %v793 = vpop.f32.mrf.mxu0
        %v794 = vadd.f32 %v701, %v793
        %v795 = vpop.f32.mrf.mxu0
        %v796 = vadd.f32 %v706, %v795
        %v797 = vpop.f32.mrf.mxu0
        %v798 = vadd.f32 %v706, %v797
        %799 = vmatprep.mubr.bf16.mxu0 0
        %800 = vmatmul.mubr.bf16.gmra.mxu0 %v755
        %v801 = vpop.f32.mrf.mxu0
        %v802 = vadd.f32 %v711, %v801
        %v803 = vpop.f32.mrf.mxu0
        %v804 = vadd.f32 %v711, %v803
        %v805 = vpop.f32.mrf.mxu0
        %v806 = vadd.f32 %v716, %v805
        %v807 = vpop.f32.mrf.mxu0
        %v808 = vadd.f32 %v716, %v807
        %809 = vdwg.mxu0
        %810 = vst [vmem:[%s300] sm:$0xff] %v792
        %811 = vst [vmem:[%s300 + $0x8] sm:$0xff] %v794
        %812 = vst [vmem:[%s300 + $0x10] sm:$0xff] %v796
        %813 = vst [vmem:[%s300 + $0x18] sm:$0xff] %v798
        %814 = vst [vmem:[%s300 + $0x20] sm:$0xff] %v802
        %815 = vst [vmem:[%s300 + $0x28] sm:$0xff] %v804
        %816 = vst [vmem:[%s300 + $0x30] sm:$0xff] %v806
        %817 = vst [vmem:[%s300 + $0x38] sm:$0xff] %v808
        %s818 = sand.u32 %s164, 1
        %s819 = scalar_lea.sflag [#allocation4], %s818
        %s820 = sand.u32 %s164, 1
        %s821 = smul.addr %s820, 64
        %s822 = scalar_lea.vmem [#allocation7], %s821
        // Predicated region
        $region49: #{tpu_custom_call.1} parent=39 // pred_check
          %p823 = pneg %p174
        $region50: #{tpu_custom_call.1} parent=39 // pred_check_branch
          %825 = sbr.rel (%p823) target = $region52
        $region51: #{tpu_custom_call.1} parent=39 // pred_region
          %s826 = smul.u32 2, %s30
          %s828 = ssub.s32 1024, 1024
          %829 = vsyncadd %s819, %s828
          %s830 = smul.addr %s29, 8
          %s831 = sadd.s32 %s826, %s830
          %s832 = smul.addr %s831, 128
          %s833 = scalar_lea.hbm %s5, %s832
          %s834 = sshll.u32 %s822, 4
          %s835 = int_to_ptr.vmem [resolvable:$true] %s834
          %840 = dma.vmem_to_hbm [thread:$0]  %s835, 1024, %s833, %s819, 256, 256, 16
        $region52: #{tpu_custom_call.1} parent=39 // pred_fallthru
          _
      $region40: #{tpu_custom_call.1} parent=5 // pred_fallthru
        _
      %p841 = scmp.le.s32.totalorder 2, %s20
      // Predicated region
      $region53: #{tpu_custom_call.1} parent=5 // pred_check
        %p842 = pneg %p841
      $region54: #{tpu_custom_call.1} parent=5 // pred_check_branch
        %844 = sbr.rel (%p842) target = $region56
      $region55: #{tpu_custom_call.1} parent=5 // pred_region
        %s845 = ssub.s32 %s20, 2
        // Predicated region
        $region57: #{tpu_custom_call.1} parent=55 // pred_check
          %p846 = pneg %p180
        $region58: #{tpu_custom_call.1} parent=55 // pred_check_branch
          %848 = sbr.rel (%p846) target = $region60
        $region59: #{tpu_custom_call.1} parent=55 // pred_region
          %s849 = sand.u32 %s165, 1
          %s850 = scalar_lea.sflag [#allocation4], %s849
          %s851 = sand.u32 %s165, 1
          %s852 = smul.addr %s851, 64
          %s853 = scalar_lea.vmem [#allocation7], %s852
          %854 = dma.done %s850, 1024
        $region60: #{tpu_custom_call.1} parent=55 // pred_fallthru
          _
      $region56: #{tpu_custom_call.1} parent=5 // pred_fallthru
        _
    $region6: #{tpu_custom_call.1} parent=1 // loop_footer
      %s24 = sadd.s32 1, %s20
    $region7: #{tpu_custom_call.1} parent=1 // loop_footer_branch
      %19 = sbr.rel target = $region3
    $region8: #{tpu_custom_call.1} parent=1 // loop_exit
      _
    %855 = vsyncpa [#allocation3], 1
    %s856 = scalar_lea.sflag [#allocation3], 1
    %857 = vsyncpa %s856, 1
    %858 = vsyncpa [#allocation6], 1
    %s859 = scalar_lea.sflag [#allocation6], 1
    %860 = vsyncpa %s859, 1
    %861 = vsyncpa [#allocation4], 1
    %s862 = scalar_lea.sflag [#allocation4], 1
    %863 = vsyncpa %s862, 1

</llo_original>
